<compile_context>
chip_gen: v5e
topology: v5e:2x2
jax: 0.10.0
libtpu: 0.0.40
codegen_flags: <defaults>
</compile_context>

<pallas_src>
import functools

import jax
import jax.numpy as jnp
from jax import lax
from jax.experimental import pallas as pl
from jax.experimental.pallas import tpu as pltpu


def _round_up(n, m):
    return ((n + m - 1) // m) * m


def _self_attention_kernel(c8p, bb, mxu_dtype, gamma_ref, x_ref, w_ref, b_ref, o_ref):
    """gamma_ref: SMEM (1,); x_ref/o_ref: (Bb, C, L); w_ref: (O, C); b_ref: (O, 1).

    Row layout of w_ref/b_ref is [q (c8p rows, zero-padded); k (c8p rows, zero-padded);
    v (C rows)], with c8p a multiple of 8 so the slices below are sublane-tile aligned.
    """
    gamma = gamma_ref[0]
    # Hoisted out of the batch loop: loaded / cast once per grid step.
    w_mx = w_ref[...].astype(mxu_dtype)          # (O, C)
    bias = b_ref[...]                            # (O, 1), f32

    def body(b, carry):
        x = x_ref[b]                                                      # (C, L) f32

        # Fused 1x1-conv projections: ONE MXU matmul (bf16 in, f32 accumulate)
        # yields q, k and v for this batch element.
        qkv = jnp.dot(w_mx, x.astype(mxu_dtype),
                      preferred_element_type=jnp.float32) + bias          # (O, L) f32
        q = qkv[:c8p].astype(mxu_dtype)                                   # (C8p, L)
        k = qkv[c8p:2 * c8p].astype(mxu_dtype)                            # (C8p, L)
        v = qkv[2 * c8p:].astype(mxu_dtype)                               # (C,  L)

        # energy[i, j] = <q[:, i], k[:, j]>  — contract the channel dim of both
        # operands; no explicit transpose is materialized by us.
        energy = lax.dot_general(q, k, (((0,), (0,)), ((), ())),
                                 preferred_element_type=jnp.float32)      # (L, L) f32

        # Numerically stable softmax over keys (last axis), all in f32;
        # reciprocal of the denominator runs on the EUP slot.
        energy = energy - jnp.max(energy, axis=-1, keepdims=True)
        p = jnp.exp(energy)
        attn = (p * pl.reciprocal(jnp.sum(p, axis=-1, keepdims=True),
                                  approx=True)).astype(mxu_dtype)         # (L, L)

        # out[c, i] = sum_j v[c, j] * attn[i, j]  — contract the key dims directly.
        out = lax.dot_general(v, attn, (((1,), (1,)), ((), ())),
                              preferred_element_type=jnp.float32)         # (C, L) f32

        # Single fused epilogue store (residual + gamma scale), no staging temporaries.
        o_ref[b] = (gamma * out + x).astype(o_ref.dtype)
        return carry

    # fori_loop (not a Python unroll) bounds the live range of the (L, L) temporaries
    # to a single batch element, keeping VMEM / vreg pressure flat in Bb.
    lax.fori_loop(0, bb, body, 0)
    # TODO(synk): for L >~ 2K, add a query-tile grid axis + online-softmax over key
    # tiles (flash style) so the (L, L) energy/attn never materializes in VMEM.
    # TODO(synk): when L is small (<128), hoist the projection to one
    # (O, C) x (C, Bb*L) matmul per grid step for better MXU occupancy (needs a
    # batch-major -> channel-major relayout of the x block).


def _physical_vmem_bytes():
    """Physical VMEM per core; conservative 64 MiB (v7x) fallback if query fails."""
    try:
        return int(pltpu.get_tpu_info().vmem_capacity_bytes)
    except Exception:
        return 64 * 2**20


def _pick_batch_block(batch, max_block):
    """Largest divisor of `batch` <= max_block, preferring an EVEN number of grid
    steps (both v7x TensorCores busy every step), then >= 2 steps."""
    max_block = max(1, min(batch, max_block))
    divisors = [d for d in range(1, max_block + 1) if batch % d == 0]
    even = [d for d in divisors if (batch // d) % 2 == 0]
    if even:
        return max(even)
    two_step = [d for d in divisors if batch // d >= 2]
    return max(two_step) if two_step else max(divisors)


def self_attention(x, params, *, max_batch_block=8, mxu_dtype=jnp.bfloat16):
    """x: (B, C, L) float32.  params: dict of wq, bq, wk, bk, wv, bv, gamma."""
    B, C, L = x.shape
    C8 = C // 8 if C >= 8 else 1
    C8p = _round_up(C8, 8)           # sublane-align the q/k slabs (f32 pack = 8)
    O = 2 * C8p + C

    f32 = jnp.float32

    def _pad_rows(w, b, rows):
        w = jnp.asarray(w, f32)
        b = jnp.asarray(b, f32)
        pad = rows - w.shape[0]
        return jnp.pad(w, ((0, pad), (0, 0))), jnp.pad(b, ((0, pad),))

    # Fuse (and pad) the projection weights so the kernel does one projection matmul
    # per batch element with tile-aligned [q; k; v] row offsets.
    wq, bq = _pad_rows(params["wq"], params["bq"], C8p)
    wk, bk = _pad_rows(params["wk"], params["bk"], C8p)
    wv = jnp.asarray(params["wv"], f32)
    bv = jnp.asarray(params["bv"], f32)
    w_fused = jnp.concatenate([wq, wk, wv], axis=0)                      # (O, C)
    b_fused = jnp.concatenate([bq, bk, bv], axis=0).reshape(O, 1)        # (O, 1)
    gamma = jnp.asarray(params["gamma"], f32).reshape(1)

    # --- batch-block / VMEM sizing -------------------------------------------------
    phys_vmem = _physical_vmem_bytes()
    # Keep the double-buffered x/out blocks within ~1/4 of physical VMEM.
    per_batch_block_bytes = 4 * C * L * 4          # x + out, double-buffered, f32
    max_bb_vmem = max(1, (phys_vmem // 4) // per_batch_block_bytes)
    Bb = _pick_batch_block(B, min(max_batch_block, max_bb_vmem))
    grid = (B // Bb,)

    # Per-grid-step VMEM need: double-buffered blocks + weights + ONE set of loop
    # temporaries (accurate because the batch loop is a fori_loop).
    block_bytes = 2 * (2 * Bb * C * L * 4)                 # x + out blocks, 2 buffers
    weight_bytes = 2 * (O * C + O) * 4                     # w + bias (worst case 2 bufs)
    temp_bytes = (O * L * 4                                # qkv (f32)
                  + (O * C + C * L + O * L) * 2            # bf16 copies of w, x, q/k/v
                  + 3 * L * L * 4                          # energy, p, attn (f32)
                  + L * L * 2                              # attn (bf16)
                  + 2 * C * L * 4)                         # out + epilogue temp
    needed = block_bytes + weight_bytes + temp_bytes
    # 2x headroom, capped at 75% of physical VMEM (≈48 MiB on v7x, ≈96 MiB on v5e/v6e).
    vmem_limit = min(max(2 * needed, 32 * 2**20), int(0.75 * phys_vmem))

    kernel = functools.partial(_self_attention_kernel, C8p, Bb, mxu_dtype)

    # Advisory cost for XLA scheduling around the custom call.
    cost = pl.CostEstimate(
        flops=2 * B * (O * C * L + C8p * L * L + C * L * L),
        transcendentals=B * L * L,
        bytes_accessed=4 * (2 * B * C * L + O * C + O + 1),
    )

    def _build_and_call(single_buffer_consts):
        const_kwargs = (
            {"pipeline_mode": pl.Buffered(1)} if single_buffer_consts else {}
        )
        grid_spec = pltpu.PrefetchScalarGridSpec(
            num_scalar_prefetch=1,                                 # gamma -> SMEM
            grid=grid,
            in_specs=[
                pl.BlockSpec((Bb, C, L), lambda b, g: (b, 0, 0)),  # x block
                pl.BlockSpec((O, C), lambda b, g: (0, 0), **const_kwargs),  # fused W
                pl.BlockSpec((O, 1), lambda b, g: (0, 0), **const_kwargs),  # fused bias
            ],
            out_specs=pl.BlockSpec((Bb, C, L), lambda b, g: (b, 0, 0)),
        )
        return pl.pallas_call(
            kernel,
            out_shape=jax.ShapeDtypeStruct((B, C, L), x.dtype),
            grid_spec=grid_spec,
            compiler_params=pltpu.CompilerParams(
                dimension_semantics=("parallel",),
                vmem_limit_bytes=vmem_limit,
            ),
            cost_estimate=cost,
        )(gamma, x, w_fused, b_fused)

    try:
        # Constant index_map -> a second buffer for W/bias is pure waste; single-buffer.
        return _build_and_call(True)
    except Exception:
        # pipeline_mode / pl.Buffered(1) not supported by this jax version:
        # fall back to default double buffering (still correct, slightly more VMEM).
        return _build_and_call(False)


def self_attention_reference(x, params):
    """Plain-JAX f32 reference mirroring the PyTorch forward."""
    wq, bq = params["wq"], params["bq"]
    wk, bk = params["wk"], params["bk"]
    wv, bv = params["wv"], params["bv"]
    gamma = params["gamma"]

    q = jnp.einsum("oc,bcl->bol", wq, x) + bq[None, :, None]      # (B, C8, L)
    k = jnp.einsum("oc,bcl->bol", wk, x) + bk[None, :, None]      # (B, C8, L)
    v = jnp.einsum("oc,bcl->bol", wv, x) + bv[None, :, None]      # (B, C, L)
    energy = jnp.einsum("bci,bcj->bij", q, k)                     # (B, L, L)
    attn = jax.nn.softmax(energy, axis=2)
    out = jnp.einsum("bcj,bij->bci", v, attn)                     # (B, C, L)
    return gamma * out + x


if __name__ == "__main__":
    # Small, lane-dense demo shapes: channels=32 -> q/k project to 32 // 8 = 4;
    # L=128 keeps the last (lane) dim dense so stores are unmasked vst.
    B, C, L = 4, 32, 128
    C8 = C // 8

    key = jax.random.PRNGKey(0)
    ks = jax.random.split(key, 8)
    params = {
        "wq": jax.random.normal(ks[0], (C8, C), jnp.float32) * 0.1,
        "bq": jax.random.normal(ks[1], (C8,), jnp.float32) * 0.1,
        "wk": jax.random.normal(ks[2], (C8, C), jnp.float32) * 0.1,
        "bk": jax.random.normal(ks[3], (C8,), jnp.float32) * 0.1,
        "wv": jax.random.normal(ks[4], (C, C), jnp.float32) * 0.1,
        "bv": jax.random.normal(ks[5], (C,), jnp.float32) * 0.1,
        # nn.Parameter(torch.zeros(1)) in the module; nonzero here so the attention
        # path is actually exercised by the test.
        "gamma": jnp.array([0.5], jnp.float32),
    }
    x = jax.random.normal(ks[6], (B, C, L), jnp.float32)

    out = jax.block_until_ready(self_attention(x, params))
    ref = jax.block_until_ready(self_attention_reference(x, params))
    assert out.shape == (B, C, L)
    # Tolerance sized for bf16 MXU operands (f32 accumulation) + the EUP approximate
    # reciprocal in the softmax denominator; the f32 residual add is exact.
    max_err = float(jnp.max(jnp.abs(out - ref)))
    assert jnp.allclose(out, ref, atol=2e-2, rtol=2e-2), max_err
    print("KERNEL_OK")
</pallas_src>

<mosaic_0001>
module attributes {stable_mosaic.version = 11 : i64} {
  func.func @_self_attention_kernel(%arg0: i32, %arg1: memref<1xf32, #tpu.memory_space<smem>>, %arg2: memref<2x32x128xf32, #tpu.memory_space<vmem>>, %arg3: memref<48x32xf32, #tpu.memory_space<vmem>>, %arg4: memref<48x1xf32, #tpu.memory_space<vmem>>, %arg5: memref<2x32x128xf32, #tpu.memory_space<vmem>>) attributes {dimension_semantics = [#tpu.dimension_semantics<parallel>], iteration_bounds = array<i64: 2>, scalar_prefetch = 1 : i64, scratch_operands = 0 : i64, tpu.core_type = #tpu.core_type<tc>, window_params = [{transform_indices = @transform_0, window_bounds = array<i64: 2, 32, 128>}, {pipeline_mode = #tpu.pipeline_mode<synchronous>, transform_indices = @transform_1, window_bounds = array<i64: 48, 32>}, {pipeline_mode = #tpu.pipeline_mode<synchronous>, transform_indices = @transform_2, window_bounds = array<i64: 48, 1>}, {transform_indices = @transform_3, window_bounds = array<i64: 2, 32, 128>}]} {
    %c0 = arith.constant 0 : index
    %0 = memref.load %arg1[%c0] : memref<1xf32, #tpu.memory_space<smem>>
    %c0_0 = arith.constant 0 : index
    %c0_1 = arith.constant 0 : index
    %1 = vector.load %arg3[%c0_0, %c0_1] : memref<48x32xf32, #tpu.memory_space<vmem>>, vector<48x32xf32>
    %2 = arith.truncf %1 : vector<48x32xf32> to vector<48x32xbf16>
    %c0_2 = arith.constant 0 : index
    %c0_3 = arith.constant 0 : index
    %3 = vector.load %arg4[%c0_2, %c0_3] : memref<48x1xf32, #tpu.memory_space<vmem>>, vector<48x1xf32>
    %c0_i32 = arith.constant 0 : i32
    %c2_i32 = arith.constant 2 : i32
    %4 = arith.addi %c0_i32, %c2_i32 : i32
    %c1_i32 = arith.constant 1 : i32
    scf.for %arg6 = %c0_i32 to %4 step %c1_i32  : i32 {
      %5 = arith.index_cast %arg6 : i32 to index
      %c0_5 = arith.constant 0 : index
      %c0_6 = arith.constant 0 : index
      %6 = vector.load %arg2[%5, %c0_5, %c0_6] : memref<2x32x128xf32, #tpu.memory_space<vmem>>, vector<1x32x128xf32>
      %7 = vector.shape_cast %6 : vector<1x32x128xf32> to vector<32x128xf32>
      %8 = arith.truncf %7 : vector<32x128xf32> to vector<32x128xbf16>
      %cst = arith.constant dense<0.000000e+00> : vector<48x128xf32>
      %9 = tpu.matmul %2, %8, %cst {dimension_numbers = #tpu.dot_dimension_numbers<[1], [0], [0], [1], [0, 0, 1, 1], [], []>} : vector<48x32xbf16>, vector<32x128xbf16>, vector<48x128xf32> -> vector<48x128xf32>
      %10 = vector.broadcast %3 : vector<48x1xf32> to vector<48x128xf32>
      %11 = arith.addf %9, %10 : vector<48x128xf32>
      %12 = vector.extract_strided_slice %11 {offsets = [0, 0], sizes = [8, 128], strides = [1, 1]} : vector<48x128xf32> to vector<8x128xf32>
      %13 = arith.truncf %12 : vector<8x128xf32> to vector<8x128xbf16>
      %14 = vector.extract_strided_slice %11 {offsets = [8, 0], sizes = [8, 128], strides = [1, 1]} : vector<48x128xf32> to vector<8x128xf32>
      %15 = arith.truncf %14 : vector<8x128xf32> to vector<8x128xbf16>
      %16 = vector.extract_strided_slice %11 {offsets = [16, 0], sizes = [32, 128], strides = [1, 1]} : vector<48x128xf32> to vector<32x128xf32>
      %17 = arith.truncf %16 : vector<32x128xf32> to vector<32x128xbf16>
      %cst_7 = arith.constant dense<0.000000e+00> : vector<128x128xf32>
      %18 = tpu.matmul %13, %15, %cst_7 {dimension_numbers = #tpu.dot_dimension_numbers<[0], [0], [1], [1], [0, 1, 1, 1], [], []>} : vector<8x128xbf16>, vector<8x128xbf16>, vector<128x128xf32> -> vector<128x128xf32>
      %cst_8 = arith.constant dense<0xFF800000> : vector<128xf32>
      %19 = vector.multi_reduction <maximumf>, %18, %cst_8 [1] : vector<128x128xf32> to vector<128xf32>
      %20 = vector.shape_cast %19 : vector<128xf32> to vector<128x1xf32>
      %21 = vector.broadcast %20 : vector<128x1xf32> to vector<128x128xf32>
      %22 = arith.subf %18, %21 : vector<128x128xf32>
      %23 = math.exp %22 : vector<128x128xf32>
      %cst_9 = arith.constant dense<0.000000e+00> : vector<128xf32>
      %24 = vector.multi_reduction <add>, %23, %cst_9 [1] : vector<128x128xf32> to vector<128xf32>
      %25 = vector.shape_cast %24 : vector<128xf32> to vector<128x1xf32>
      %26 = tpu.reciprocal %25 {approx = true} : vector<128x1xf32> -> vector<128x1xf32>
      %27 = vector.broadcast %26 : vector<128x1xf32> to vector<128x128xf32>
      %28 = arith.mulf %23, %27 : vector<128x128xf32>
      %29 = arith.truncf %28 : vector<128x128xf32> to vector<128x128xbf16>
      %cst_10 = arith.constant dense<0.000000e+00> : vector<32x128xf32>
      %30 = tpu.matmul %17, %29, %cst_10 {dimension_numbers = #tpu.dot_dimension_numbers<[1], [1], [0], [0], [0, 0, 1, 0], [], []>} : vector<32x128xbf16>, vector<128x128xbf16>, vector<32x128xf32> -> vector<32x128xf32>
      %31 = vector.broadcast %0 : f32 to vector<32x128xf32>
      %32 = arith.mulf %31, %30 : vector<32x128xf32>
      %33 = arith.addf %32, %7 : vector<32x128xf32>
      %34 = arith.index_cast %arg6 : i32 to index
      %c0_11 = arith.constant 0 : index
      %c0_12 = arith.constant 0 : index
      %35 = vector.load %arg5[%34, %c0_11, %c0_12] : memref<2x32x128xf32, #tpu.memory_space<vmem>>, vector<1x32x128xf32>
      %36 = vector.shape_cast %35 : vector<1x32x128xf32> to vector<32x128xf32>
      %37 = vector.shape_cast %33 : vector<32x128xf32> to vector<1x32x128xf32>
      tpu.vector_store %arg5[%34, %c0_11, %c0_12], %37 {strides = array<i32>} : memref<2x32x128xf32, #tpu.memory_space<vmem>>, vector<1x32x128xf32>,
    }
    %c2_i32_4 = arith.constant 2 : i32
    return
  }
  func.func @transform_0(%arg0: i32, %arg1: memref<1xf32, #tpu.memory_space<smem>>) -> (i32, i32, i32) {
    %c0_i32 = arith.constant 0 : i32
    %c0_i32_0 = arith.constant 0 : i32
    %c0_i32_1 = arith.constant 0 : i32
    return %arg0, %c0_i32, %c0_i32_0 : i32, i32, i32
  }
  func.func @transform_1(%arg0: i32, %arg1: memref<1xf32, #tpu.memory_space<smem>>) -> (i32, i32) {
    %c0_i32 = arith.constant 0 : i32
    %c0_i32_0 = arith.constant 0 : i32
    %c0_i32_1 = arith.constant 0 : i32
    return %c0_i32, %c0_i32_0 : i32, i32
  }
  func.func @transform_2(%arg0: i32, %arg1: memref<1xf32, #tpu.memory_space<smem>>) -> (i32, i32) {
    %c0_i32 = arith.constant 0 : i32
    %c0_i32_0 = arith.constant 0 : i32
    %c0_i32_1 = arith.constant 0 : i32
    return %c0_i32, %c0_i32_0 : i32, i32
  }
  func.func @transform_3(%arg0: i32, %arg1: memref<1xf32, #tpu.memory_space<smem>>) -> (i32, i32, i32) {
    %c0_i32 = arith.constant 0 : i32
    %c0_i32_0 = arith.constant 0 : i32
    %c0_i32_1 = arith.constant 0 : i32
    return %arg0, %c0_i32, %c0_i32_0 : i32, i32, i32
  }
}

module attributes {stable_mosaic.version = 11 : i64} {
  func.func @_self_attention_kernel(%arg0: i32, %arg1: memref<1xf32, #tpu.memory_space<smem>>, %arg2: memref<2x32x128xf32, #tpu.memory_space<vmem>>, %arg3: memref<48x32xf32, #tpu.memory_space<vmem>>, %arg4: memref<48x1xf32, #tpu.memory_space<vmem>>, %arg5: memref<2x32x128xf32, #tpu.memory_space<vmem>>) attributes {dimension_semantics = [#tpu.dimension_semantics<parallel>], iteration_bounds = array<i64: 2>, scalar_prefetch = 1 : i64, scratch_operands = 0 : i64, tpu.core_type = #tpu.core_type<tc>, window_params = [{transform_indices = @transform_0, window_bounds = array<i64: 2, 32, 128>}, {pipeline_mode = #tpu.pipeline_mode<synchronous>, transform_indices = @transform_1, window_bounds = array<i64: 48, 32>}, {pipeline_mode = #tpu.pipeline_mode<synchronous>, transform_indices = @transform_2, window_bounds = array<i64: 48, 1>}, {transform_indices = @transform_3, window_bounds = array<i64: 2, 32, 128>}]} {
    %c0 = arith.constant 0 : index
    %0 = memref.load %arg1[%c0] : memref<1xf32, #tpu.memory_space<smem>>
    %c0_0 = arith.constant 0 : index
    %c0_1 = arith.constant 0 : index
    %1 = vector.load %arg3[%c0_0, %c0_1] : memref<48x32xf32, #tpu.memory_space<vmem>>, vector<48x32xf32>
    %2 = arith.truncf %1 : vector<48x32xf32> to vector<48x32xbf16>
    %c0_2 = arith.constant 0 : index
    %c0_3 = arith.constant 0 : index
    %3 = vector.load %arg4[%c0_2, %c0_3] : memref<48x1xf32, #tpu.memory_space<vmem>>, vector<48x1xf32>
    %c0_i32 = arith.constant 0 : i32
    %c2_i32 = arith.constant 2 : i32
    %4 = arith.addi %c0_i32, %c2_i32 : i32
    %c1_i32 = arith.constant 1 : i32
    scf.for %arg6 = %c0_i32 to %4 step %c1_i32  : i32 {
      %5 = arith.index_cast %arg6 : i32 to index
      %c0_5 = arith.constant 0 : index
      %c0_6 = arith.constant 0 : index
      %6 = vector.load %arg2[%5, %c0_5, %c0_6] : memref<2x32x128xf32, #tpu.memory_space<vmem>>, vector<1x32x128xf32>
      %7 = vector.shape_cast %6 : vector<1x32x128xf32> to vector<32x128xf32>
      %8 = arith.truncf %7 : vector<32x128xf32> to vector<32x128xbf16>
      %cst = arith.constant dense<0.000000e+00> : vector<48x128xf32>
      %9 = tpu.matmul %2, %8, %cst {dimension_numbers = #tpu.dot_dimension_numbers<[1], [0], [0], [1], [0, 0, 1, 1], [], []>} : vector<48x32xbf16>, vector<32x128xbf16>, vector<48x128xf32> -> vector<48x128xf32>
      %10 = vector.broadcast %3 : vector<48x1xf32> to vector<48x128xf32>
      %11 = arith.addf %9, %10 : vector<48x128xf32>
      %12 = vector.extract_strided_slice %11 {offsets = [0, 0], sizes = [8, 128], strides = [1, 1]} : vector<48x128xf32> to vector<8x128xf32>
      %13 = arith.truncf %12 : vector<8x128xf32> to vector<8x128xbf16>
      %14 = vector.extract_strided_slice %11 {offsets = [8, 0], sizes = [8, 128], strides = [1, 1]} : vector<48x128xf32> to vector<8x128xf32>
      %15 = arith.truncf %14 : vector<8x128xf32> to vector<8x128xbf16>
      %16 = vector.extract_strided_slice %11 {offsets = [16, 0], sizes = [32, 128], strides = [1, 1]} : vector<48x128xf32> to vector<32x128xf32>
      %17 = arith.truncf %16 : vector<32x128xf32> to vector<32x128xbf16>
      %cst_7 = arith.constant dense<0.000000e+00> : vector<128x128xf32>
      %18 = tpu.matmul %13, %15, %cst_7 {dimension_numbers = #tpu.dot_dimension_numbers<[0], [0], [1], [1], [0, 1, 1, 1], [], []>} : vector<8x128xbf16>, vector<8x128xbf16>, vector<128x128xf32> -> vector<128x128xf32>
      %cst_8 = arith.constant dense<0xFF800000> : vector<128xf32>
      %19 = vector.multi_reduction <maximumf>, %18, %cst_8 [1] : vector<128x128xf32> to vector<128xf32>
      %20 = vector.shape_cast %19 : vector<128xf32> to vector<128x1xf32>
      %21 = vector.broadcast %20 : vector<128x1xf32> to vector<128x128xf32>
      %22 = arith.subf %18, %21 : vector<128x128xf32>
      %23 = math.exp %22 : vector<128x128xf32>
      %cst_9 = arith.constant dense<0.000000e+00> : vector<128xf32>
      %24 = vector.multi_reduction <add>, %23, %cst_9 [1] : vector<128x128xf32> to vector<128xf32>
      %25 = vector.shape_cast %24 : vector<128xf32> to vector<128x1xf32>
      %26 = tpu.reciprocal %25 {approx = true} : vector<128x1xf32> -> vector<128x1xf32>
      %27 = vector.broadcast %26 : vector<128x1xf32> to vector<128x128xf32>
      %28 = arith.mulf %23, %27 : vector<128x128xf32>
      %29 = arith.truncf %28 : vector<128x128xf32> to vector<128x128xbf16>
      %cst_10 = arith.constant dense<0.000000e+00> : vector<32x128xf32>
      %30 = tpu.matmul %17, %29, %cst_10 {dimension_numbers = #tpu.dot_dimension_numbers<[1], [1], [0], [0], [0, 0, 1, 0], [], []>} : vector<32x128xbf16>, vector<128x128xbf16>, vector<32x128xf32> -> vector<32x128xf32>
      %31 = vector.broadcast %0 : f32 to vector<32x128xf32>
      %32 = arith.mulf %31, %30 : vector<32x128xf32>
      %33 = arith.addf %32, %7 : vector<32x128xf32>
      %34 = arith.index_cast %arg6 : i32 to index
      %c0_11 = arith.constant 0 : index
      %c0_12 = arith.constant 0 : index
      %35 = vector.load %arg5[%34, %c0_11, %c0_12] : memref<2x32x128xf32, #tpu.memory_space<vmem>>, vector<1x32x128xf32>
      %36 = vector.shape_cast %35 : vector<1x32x128xf32> to vector<32x128xf32>
      %37 = vector.shape_cast %33 : vector<32x128xf32> to vector<1x32x128xf32>
      tpu.vector_store %arg5[%34, %c0_11, %c0_12], %37 {strides = array<i32>} : memref<2x32x128xf32, #tpu.memory_space<vmem>>, vector<1x32x128xf32>,
    }
    %c2_i32_4 = arith.constant 2 : i32
    return
  }
  func.func @transform_0(%arg0: i32, %arg1: memref<1xf32, #tpu.memory_space<smem>>) -> (i32, i32, i32) {
    %c0_i32 = arith.constant 0 : i32
    %c0_i32_0 = arith.constant 0 : i32
    %c0_i32_1 = arith.constant 0 : i32
    return %arg0, %c0_i32, %c0_i32_0 : i32, i32, i32
  }
  func.func @transform_1(%arg0: i32, %arg1: memref<1xf32, #tpu.memory_space<smem>>) -> (i32, i32) {
    %c0_i32 = arith.constant 0 : i32
    %c0_i32_0 = arith.constant 0 : i32
    %c0_i32_1 = arith.constant 0 : i32
    return %c0_i32, %c0_i32_0 : i32, i32
  }
  func.func @transform_2(%arg0: i32, %arg1: memref<1xf32, #tpu.memory_space<smem>>) -> (i32, i32) {
    %c0_i32 = arith.constant 0 : i32
    %c0_i32_0 = arith.constant 0 : i32
    %c0_i32_1 = arith.constant 0 : i32
    return %c0_i32, %c0_i32_0 : i32, i32
  }
  func.func @transform_3(%arg0: i32, %arg1: memref<1xf32, #tpu.memory_space<smem>>) -> (i32, i32, i32) {
    %c0_i32 = arith.constant 0 : i32
    %c0_i32_0 = arith.constant 0 : i32
    %c0_i32_1 = arith.constant 0 : i32
    return %arg0, %c0_i32, %c0_i32_0 : i32, i32, i32
  }
}

</mosaic_0001>

<llo_original>
// kernel: tpu_custom_call.1
$region0: #{tpu_custom_call.1}
  #allocation0 [shape = 'u32[]', space=smem, size = 0x4, offset = 0x4, fixed_abs, tag = 'smem constant byte address 0x4 - core index']
  #allocation1 [shape = 'u32[72,128]{1,0:T(1,128)}', space=vmem, size = 0x9000, scoped, tag = 'internal scratch']
  #allocation2 [shape = 's32[1]{0}', space=sflag, size = 0x4, scoped, tag = 'scoped memory for tpu_custom_call.1']
  #allocation3 [shape = 'f32[1]{0:T(128)S(6)}', space=smem, size = 0x200, scoped, tag = 'prefetched SMEM operand 0']
  %s0 = inlined_call_operand.<no memory space> [shape: f32[1], index: 0, kind: input, shape index: {}]
  %s1 = inlined_call_operand.vmem [shape: f32[4,32,128], index: 1, kind: input, shape index: {}]
  %s2 = inlined_call_operand.vmem [shape: f32[48,32], index: 2, kind: input, shape index: {}]
  %s3 = inlined_call_operand.vmem [shape: f32[48,1], index: 3, kind: input, shape index: {}]
  %s4 = inlined_call_operand.hbm [shape: f32[4,32,128], index: 4, kind: output, shape index: {}]
  %s5 = sld [smem:[#allocation0]]
  $region52: #{tpu_custom_call.1} parent=0
    _
  %s7 = ssub.s32 1, %s5
  %s8 = scalar_select 0, %s7, %s5
  %9 = sst [smem:[#allocation3]] %s0
  $region1: #{tpu_custom_call.1} parent=0
    #allocation4 [shape = 'u8[65536]{0}', space=vmem, size = 0x10000, scoped, tag = 'output window, operand 0']
    #allocation5 [shape = 's32[2]{0}', space=sflag, size = 0x8, scoped, tag = 'scoped memory for tpu_custom_call.1']
    %10 = vsyncpa [#allocation5], 0
    %s11 = scalar_lea.sflag [#allocation5], 1
    %12 = vsyncpa %s11, 0
    loop: start=0, step=1, limit=4
    $region2: #{tpu_custom_call.1} parent=1 // loop_pre_header
      _
    $region3: #{tpu_custom_call.1} parent=1 // loop_header
      %s14 = sphi 0, %s18
      %p15 = scmp.ge.s32.totalorder %s14, 4
      %s24 = sphi 0, %s26
      %s27 = sphi 0, %s24
      %s28 = sphi 0, %s27
      %s44 = sphi 0, %s28
      %s48 = sphi 0, %s48
      %s50 = sphi 0, %s48
      %s51 = sphi 0, %s50
      %s65 = sphi 0, %s51
      %s69 = sphi 0, %s69
      %s71 = sphi 0, %s69
      %s72 = sphi 0, %s71
      %s86 = sphi 0, %s72
      %s92 = sphi 0, %s94
      %s95 = sphi 0, %s92
      %s96 = sphi 0, %s95
      %s112 = sphi 0, %s96
    $region4: #{tpu_custom_call.1} parent=1 // loop_header_branch
      %17 = sbr.rel (%p15) target = $region8
    $region5: #{tpu_custom_call.1} parent=1 // loop_body
      %s19 = ssub.s32 %s14, 1
      %s20 = ssub.s32 %s14, 2
      %s21 = sadd.s32 %s14, 1
      %s22 = ssub.s32 %s14, %s21
      %p23 = scmp.eq.s32.totalorder %s22, 0
      %s25 = sadd.s32 %s24, 1
      %s26 = scalar_select %p23, %s24, %s25
      %p29 = pneg %p23
      %p30 = scmp.eq.s32.totalorder %s14, 1
      %p31 = por %p29, %p30
      %p32 = scmp.ne.s32.totalorder %s24, %s27
      %p33 = scmp.eq.s32.totalorder %s14, 0
      %p34 = por %p32, %p33
      %p35 = scmp.ne.s32.totalorder %s24, %s27
      %p36 = scmp.eq.s32.totalorder %s19, 1
      %p37 = por %p35, %p36
      %p38 = scmp.ne.s32.totalorder %s27, %s28
      %p39 = scmp.eq.s32.totalorder %s19, 0
      %p40 = por %p38, %p39
      %p41 = scmp.ne.s32.totalorder %s27, %s28
      %p42 = scmp.eq.s32.totalorder %s20, 1
      %p43 = por %p41, %p42
      %p45 = scmp.ne.s32.totalorder %s28, %s44
      %p46 = scmp.eq.s32.totalorder %s20, 0
      %p47 = por %p45, %p46
      %s49 = sadd.s32 %s48, 1
      %p52 = scmp.eq.s32.totalorder %s14, 1
      %p53 = scmp.ne.s32.totalorder %s48, %s50
      %p54 = scmp.eq.s32.totalorder %s14, 0
      %p55 = por %p53, %p54
      %p56 = scmp.ne.s32.totalorder %s48, %s50
      %p57 = scmp.eq.s32.totalorder %s19, 1
      %p58 = por %p56, %p57
      %p59 = scmp.ne.s32.totalorder %s50, %s51
      %p60 = scmp.eq.s32.totalorder %s19, 0
      %p61 = por %p59, %p60
      %p62 = scmp.ne.s32.totalorder %s50, %s51
      %p63 = scmp.eq.s32.totalorder %s20, 1
      %p64 = por %p62, %p63
      %p66 = scmp.ne.s32.totalorder %s51, %s65
      %p67 = scmp.eq.s32.totalorder %s20, 0
      %p68 = por %p66, %p67
      %s70 = sadd.s32 %s69, 1
      %p73 = scmp.eq.s32.totalorder %s14, 1
      %p74 = scmp.ne.s32.totalorder %s69, %s71
      %p75 = scmp.eq.s32.totalorder %s14, 0
      %p76 = por %p74, %p75
      %p77 = scmp.ne.s32.totalorder %s69, %s71
      %p78 = scmp.eq.s32.totalorder %s19, 1
      %p79 = por %p77, %p78
      %p80 = scmp.ne.s32.totalorder %s71, %s72
      %p81 = scmp.eq.s32.totalorder %s19, 0
      %p82 = por %p80, %p81
      %p83 = scmp.ne.s32.totalorder %s71, %s72
      %p84 = scmp.eq.s32.totalorder %s20, 1
      %p85 = por %p83, %p84
      %p87 = scmp.ne.s32.totalorder %s72, %s86
      %p88 = scmp.eq.s32.totalorder %s20, 0
      %p89 = por %p87, %p88
      %s90 = ssub.s32 %s14, %s21
      %p91 = scmp.eq.s32.totalorder %s90, 0
      %s93 = sadd.s32 %s92, 1
      %s94 = scalar_select %p91, %s92, %s93
      %p97 = pneg %p91
      %p98 = scmp.eq.s32.totalorder %s14, 1
      %p99 = por %p97, %p98
      %p100 = scmp.ne.s32.totalorder %s92, %s95
      %p101 = scmp.eq.s32.totalorder %s14, 0
      %p102 = por %p100, %p101
      %p103 = scmp.ne.s32.totalorder %s92, %s95
      %p104 = scmp.eq.s32.totalorder %s19, 1
      %p105 = por %p103, %p104
      %p106 = scmp.ne.s32.totalorder %s95, %s96
      %p107 = scmp.eq.s32.totalorder %s19, 0
      %p108 = por %p106, %p107
      %p109 = scmp.ne.s32.totalorder %s95, %s96
      %p110 = scmp.eq.s32.totalorder %s20, 1
      %p111 = por %p109, %p110
      %p113 = scmp.ne.s32.totalorder %s96, %s112
      %p114 = scmp.eq.s32.totalorder %s20, 0
      %p115 = por %p113, %p114
      %p116 = scmp.le.s32.totalorder 1, %s14
      %p117 = scmp.lt.s32.totalorder %s14, 3
      %p118 = pnand %p116, %p117
      %p119 = pneg %p118
      // Predicated region
      $region9: #{tpu_custom_call.1} parent=5 // pred_check
        _
      $region10: #{tpu_custom_call.1} parent=5 // pred_check_branch
        %121 = sbr.rel (%p118) target = $region12
      $region11: #{tpu_custom_call.1} parent=5 // pred_region
        %s122 = ssub.s32 %s14, 1
        // Predicated region
        $region13: #{tpu_custom_call.1} parent=11 // pred_check
          %p123 = pneg %p61
        $region14: #{tpu_custom_call.1} parent=11 // pred_check_branch
          %125 = sbr.rel (%p123) target = $region16
        $region15: #{tpu_custom_call.1} parent=11 // pred_region
          _
        $region16: #{tpu_custom_call.1} parent=11 // pred_fallthru
          _
        // Predicated region
        $region17: #{tpu_custom_call.1} parent=11 // pred_check
          %p126 = pneg %p82
        $region18: #{tpu_custom_call.1} parent=11 // pred_check_branch
          %128 = sbr.rel (%p126) target = $region20
        $region19: #{tpu_custom_call.1} parent=11 // pred_region
          _
        $region20: #{tpu_custom_call.1} parent=11 // pred_fallthru
          _
      $region12: #{tpu_custom_call.1} parent=5 // pred_fallthru
        _
      %p129 = scmp.lt.s32.totalorder %s14, 2
      // Predicated region
      $region21: #{tpu_custom_call.1} parent=5 // pred_check
        %p130 = pneg %p129
      $region22: #{tpu_custom_call.1} parent=5 // pred_check_branch
        %132 = sbr.rel (%p130) target = $region24
      $region23: #{tpu_custom_call.1} parent=5 // pred_region
        // Predicated region
        $region25: #{tpu_custom_call.1} parent=23 // pred_check
          %p133 = pneg %p34
        $region26: #{tpu_custom_call.1} parent=23 // pred_check_branch
          %135 = sbr.rel (%p133) target = $region28
        $region27: #{tpu_custom_call.1} parent=23 // pred_region
          %s136 = smul.u32 2, %s14
          %p137 = scmp.lt.s32.totalorder %s136, 3
          %s138 = scalar_select %p137, %s136, 3
          %s139 = smul.addr %s138, 4
          %s140 = smul.addr %s139, 8
          %s141 = scalar_lea.vmem %s1, %s140
          %s142 = smul.u32 2, %s14
        $region28: #{tpu_custom_call.1} parent=23 // pred_fallthru
          _
      $region24: #{tpu_custom_call.1} parent=5 // pred_fallthru
        _
      %p143 = scmp.le.s32.totalorder 1, %s14
      %p144 = scmp.lt.s32.totalorder %s14, 3
      %p145 = pnand %p143, %p144
      %p146 = pneg %p145
      // Predicated region
      $region29: #{tpu_custom_call.1} parent=5 // pred_check
        _
      $region30: #{tpu_custom_call.1} parent=5 // pred_check_branch
        %148 = sbr.rel (%p145) target = $region32
      $region31: #{tpu_custom_call.1} parent=5 // pred_region
        %s149 = ssub.s32 %s14, 1
        %s150 = smul.u32 2, %s19
        %p151 = scmp.lt.s32.totalorder %s150, 3
        %s152 = scalar_select %p151, %s150, 3
        %s153 = smul.addr %s152, 4
        %s154 = smul.addr %s153, 8
        %s155 = scalar_lea.vmem %s1, %s154
        %p156 = pneg %p40
        %p157 = pneg %p37
        %p158 = pneg %p61
        %p159 = pneg %p58
        %p160 = pneg %p82
        %p161 = pneg %p79
        %p162 = pneg %p108
        %p163 = pneg %p105
        %s164 = sand.u32 %s95, 1
        %s165 = scalar_lea.sflag [#allocation5], %s164
        %s166 = sand.u32 %s95, 1
        %s167 = smul.addr %s166, 64
        %s168 = scalar_lea.vmem [#allocation4], %s167
        %s169 = smul.u32 2, %s19
        %p170 = scmp.lt.s32.totalorder %s169, 3
        %s171 = scalar_select %p170, %s169, 3
        %s172 = smul.addr %s171, 4
        %s173 = smul.addr %s172, 8
        %s174 = scalar_lea.vmem %s1, %s173
        %s175 = smul.u32 2, %s19
        %s176 = smul.u32 2, %s19
        %s178 = sld [smem:[#allocation3]]
        %v179 = vld [vmem:[%s2] sm:$0xff]
        %v180 = vld [vmem:[%s2 + $0x8] sm:$0xff]
        %v181 = vld [vmem:[%s2 + $0x10] sm:$0xff]
        %v182 = vld [vmem:[%s2 + $0x18] sm:$0xff]
        %v183 = vld [vmem:[%s2 + $0x20] sm:$0xff]
        %v184 = vld [vmem:[%s2 + $0x28] sm:$0xff]
        %v185 = vpack.c.bf16 %v180, %v179
        %v186 = vpack.c.bf16 %v182, %v181
        %v187 = vpack.c.bf16 %v184, %v183
        %v188 = vld [vmem:[%s3] sm:$0xff]
        %v189 = vld [vmem:[%s3 + $0x8] sm:$0xff]
        %v190 = vld [vmem:[%s3 + $0x10] sm:$0xff]
        %v191 = vld [vmem:[%s3 + $0x18] sm:$0xff]
        %v192 = vld [vmem:[%s3 + $0x20] sm:$0xff]
        %v193 = vld [vmem:[%s3 + $0x28] sm:$0xff]
        loop: start=0, step=1, limit=2
        $region33: #{tpu_custom_call.1} parent=31 // loop_pre_header
          _
        $region34: #{tpu_custom_call.1} parent=31 // loop_header
          %s195 = sphi 0, %s199
          %p196 = scmp.ge.s32.totalorder %s195, 2
        $region35: #{tpu_custom_call.1} parent=31 // loop_header_branch
          %198 = sbr.rel (%p196) target = $region39
        $region36: #{tpu_custom_call.1} parent=31 // loop_body
          %s200 = smul.u32 %s195, 32
          %s201 = scalar_lea.vmem %s174, %s200
          %v202 = vld [vmem:[%s201] sm:$0xff]
          %v203 = vld [vmem:[%s201 + $0x8] sm:$0xff]
          %v204 = vld [vmem:[%s201 + $0x10] sm:$0xff]
          %v205 = vld [vmem:[%s201 + $0x18] sm:$0xff]
          %v206 = vpack.c.bf16 %v203, %v202
          %v207 = vpack.c.bf16 %v205, %v204
          %209 = vset.pattern.permute.xlu0 0
          %210 = vperm.xlu0 %209, %v188
          %v211 = vpop.permute.xlu0 %210
          %214 = vset.pattern.permute.xlu0 0
          %215 = vperm.xlu0 %214, %v189
          %v216 = vpop.permute.xlu0 %215
          %219 = vset.pattern.permute.xlu0 0
          %220 = vperm.xlu0 %219, %v190
          %v221 = vpop.permute.xlu0 %220
          %224 = vset.pattern.permute.xlu0 0
          %225 = vperm.xlu0 %224, %v191
          %v226 = vpop.permute.xlu0 %225
          %229 = vset.pattern.permute.xlu0 0
          %230 = vperm.xlu0 %229, %v192
          %v231 = vpop.permute.xlu0 %230
          %234 = vset.pattern.permute.xlu0 0
          %235 = vperm.xlu0 %234, %v193
          %v236 = vpop.permute.xlu0 %235
          %vm238 = vcmask 261120
          %v240 = vsel %vm238, %v185, 0
          %v243 = vsel %vm238, %v186, 0
          %v246 = vsel %vm238, %v187, 0
          %248 = vmatpush.bf16.msra.mxu0 0
          %249 = vmatpush.bf16.msra.mxu0 0
          %250 = vmatpush.bf16.msra.mxu0 0
          %251 = vmatpush.bf16.msra.mxu0 0
          %252 = vmatpush.bf16.msra.mxu0 0
          %253 = vmatpush.bf16.msra.mxu0 0
          %254 = vmatpush.bf16.msra.mxu0 %v207
          %255 = vmatpush.bf16.msra.mxu0 %v206
          %256 = vmatmul.bf16.gmra.mxu0 %v240
          %v257 = vpop.f32.mrf.mxu0
          %v258 = vadd.f32 %v211, %v257
          %v259 = vpop.f32.mrf.mxu0
          %v260 = vadd.f32 %v216, %v259
          %261 = vmatmul.bf16.gmra.mxu0 %v243
          %v262 = vpop.f32.mrf.mxu0
          %v263 = vadd.f32 %v221, %v262
          %v264 = vpop.f32.mrf.mxu0
          %v265 = vadd.f32 %v226, %v264
          %266 = vmatmul.bf16.gmra.mxu0 %v246
          %v267 = vpop.f32.mrf.mxu0
          %v268 = vadd.f32 %v231, %v267
          %v269 = vpop.f32.mrf.mxu0
          %v270 = vadd.f32 %v236, %v269
          %271 = vdwg.mxu0
          %v272 = vpack.c.bf16 %v258, %v258
          %v273 = vpack.c.bf16 %v260, %v260
          %v274 = vpack.c.bf16 %v265, %v263
          %v275 = vpack.c.bf16 %v270, %v268
          %276 = vxpose.xlu0.c.b16.start [1/8] %v272, 128
          %277 = vxpose.xlu0.c.b16.cont [2/8] 0, 128
          %278 = vxpose.xlu0.c.b16.cont [3/8] 0, 128
          %279 = vxpose.xlu0.c.b16.cont [4/8] 0, 128
          %280 = vxpose.xlu0.c.b16.cont [5/8] 0, 128
          %281 = vxpose.xlu0.c.b16.cont [6/8] 0, 128
          %282 = vxpose.xlu0.c.b16.cont [7/8] 0, 128
          %283 = vxpose.xlu0.c.b16.end [8/8] 0, 128
          %v284 = vpop.trf.xlu0
          %v285 = vpop.trf.xlu0
          %v286 = vpop.trf.xlu0
          %v287 = vpop.trf.xlu0
          %v288 = vpop.trf.xlu0
          %v289 = vpop.trf.xlu0
          %v290 = vpop.trf.xlu0
          %v291 = vpop.trf.xlu0
          %vm292 = vcmask 64512
          %v294 = vsel %vm292, %v284, 0
          %v297 = vsel %vm292, %v285, 0
          %v300 = vsel %vm292, %v286, 0
          %v303 = vsel %vm292, %v287, 0
          %v306 = vsel %vm292, %v288, 0
          %v309 = vsel %vm292, %v289, 0
          %v312 = vsel %vm292, %v290, 0
          %v315 = vsel %vm292, %v291, 0
          %vm317 = vcmask 1043456
          %v319 = vsel %vm317, %v273, 0
          %321 = vmatpush.bf16.msra.mxu0 0
          %322 = vmatpush.bf16.msra.mxu0 0
          %323 = vmatpush.bf16.msra.mxu0 0
          %324 = vmatpush.bf16.msra.mxu0 0
          %325 = vmatpush.bf16.msra.mxu0 0
          %326 = vmatpush.bf16.msra.mxu0 0
          %327 = vmatpush.bf16.msra.mxu0 0
          %328 = vmatpush.bf16.msra.mxu0 %v319
          %329 = vmatmul.bf16.gmra.mxu0 %v294
          %v330 = vpop.f32.mrf.mxu0
          %v331 = vadd.f32 0.0, %v330
          %v332 = vpop.f32.mrf.mxu0
          %v333 = vadd.f32 0.0, %v332
          %334 = vmatmul.bf16.gmra.mxu0 %v297
          %v335 = vpop.f32.mrf.mxu0
          %v336 = vadd.f32 0.0, %v335
          %v337 = vpop.f32.mrf.mxu0
          %v338 = vadd.f32 0.0, %v337
          %339 = vmatmul.bf16.gmra.mxu0 %v300
          %v340 = vpop.f32.mrf.mxu0
          %v341 = vadd.f32 0.0, %v340
          %v342 = vpop.f32.mrf.mxu0
          %v343 = vadd.f32 0.0, %v342
          %344 = vmatmul.bf16.gmra.mxu0 %v303
          %v345 = vpop.f32.mrf.mxu0
          %v346 = vadd.f32 0.0, %v345
          %v347 = vpop.f32.mrf.mxu0
          %v348 = vadd.f32 0.0, %v347
          %349 = vmatmul.bf16.gmra.mxu0 %v306
          %v350 = vpop.f32.mrf.mxu0
          %v351 = vadd.f32 0.0, %v350
          %v352 = vpop.f32.mrf.mxu0
          %v353 = vadd.f32 0.0, %v352
          %354 = vmatmul.bf16.gmra.mxu0 %v309
          %v355 = vpop.f32.mrf.mxu0
          %v356 = vadd.f32 0.0, %v355
          %v357 = vpop.f32.mrf.mxu0
          %v358 = vadd.f32 0.0, %v357
          %359 = vmatmul.bf16.gmra.mxu0 %v312
          %v360 = vpop.f32.mrf.mxu0
          %v361 = vadd.f32 0.0, %v360
          %v362 = vpop.f32.mrf.mxu0
          %v363 = vadd.f32 0.0, %v362
          %364 = vmatmul.bf16.gmra.mxu0 %v315
          %v365 = vpop.f32.mrf.mxu0
          %v366 = vadd.f32 0.0, %v365
          %v367 = vpop.f32.mrf.mxu0
          %v368 = vadd.f32 0.0, %v367
          %369 = vdwg.mxu0
          %370 = vmax.xlane.f32.xlu0 %v331
          %v371 = vpop.xlane.xlu0 %370
          %372 = vmax.xlane.f32.xlu0 %v333
          %v373 = vpop.xlane.xlu0 %372
          %374 = vmax.xlane.f32.xlu0 %v336
          %v375 = vpop.xlane.xlu0 %374
          %376 = vmax.xlane.f32.xlu0 %v338
          %v377 = vpop.xlane.xlu0 %376
          %378 = vmax.xlane.f32.xlu0 %v341
          %v379 = vpop.xlane.xlu0 %378
          %380 = vmax.xlane.f32.xlu0 %v343
          %v381 = vpop.xlane.xlu0 %380
          %382 = vmax.xlane.f32.xlu0 %v346
          %v383 = vpop.xlane.xlu0 %382
          %384 = vmax.xlane.f32.xlu0 %v348
          %v385 = vpop.xlane.xlu0 %384
          %386 = vmax.xlane.f32.xlu0 %v351
          %v387 = vpop.xlane.xlu0 %386
          %388 = vmax.xlane.f32.xlu0 %v353
          %v389 = vpop.xlane.xlu0 %388
          %390 = vmax.xlane.f32.xlu0 %v356
          %v391 = vpop.xlane.xlu0 %390
          %392 = vmax.xlane.f32.xlu0 %v358
          %v393 = vpop.xlane.xlu0 %392
          %394 = vmax.xlane.f32.xlu0 %v361
          %v395 = vpop.xlane.xlu0 %394
          %396 = vmax.xlane.f32.xlu0 %v363
          %v397 = vpop.xlane.xlu0 %396
          %398 = vmax.xlane.f32.xlu0 %v366
          %v399 = vpop.xlane.xlu0 %398
          %400 = vmax.xlane.f32.xlu0 %v368
          %v401 = vpop.xlane.xlu0 %400
          %v402 = vsub.f32 %v331, %v371
          %v403 = vsub.f32 %v333, %v373
          %v404 = vsub.f32 %v336, %v375
          %v405 = vsub.f32 %v338, %v377
          %v406 = vsub.f32 %v341, %v379
          %v407 = vsub.f32 %v343, %v381
          %v408 = vsub.f32 %v346, %v383
          %v409 = vsub.f32 %v348, %v385
          %v410 = vsub.f32 %v351, %v387
          %v411 = vsub.f32 %v353, %v389
          %v412 = vsub.f32 %v356, %v391
          %v413 = vsub.f32 %v358, %v393
          %v414 = vsub.f32 %v361, %v395
          %v415 = vsub.f32 %v363, %v397
          %v416 = vsub.f32 %v366, %v399
          %v417 = vsub.f32 %v368, %v401
          %v418 = vmul.f32 %v402, 1.442695
          %v419 = vpow.pop %v418
          %v420 = vmul.f32 %v403, 1.442695
          %v421 = vpow.pop %v420
          %v422 = vmul.f32 %v404, 1.442695
          %v423 = vpow.pop %v422
          %v424 = vmul.f32 %v405, 1.442695
          %v425 = vpow.pop %v424
          %v426 = vmul.f32 %v406, 1.442695
          %v427 = vpow.pop %v426
          %v428 = vmul.f32 %v407, 1.442695
          %v429 = vpow.pop %v428
          %v430 = vmul.f32 %v408, 1.442695
          %v431 = vpow.pop %v430
          %v432 = vmul.f32 %v409, 1.442695
          %v433 = vpow.pop %v432
          %v434 = vmul.f32 %v410, 1.442695
          %v435 = vpow.pop %v434
          %v436 = vmul.f32 %v411, 1.442695
          %v437 = vpow.pop %v436
          %v438 = vmul.f32 %v412, 1.442695
          %v439 = vpow.pop %v438
          %v440 = vmul.f32 %v413, 1.442695
          %v441 = vpow.pop %v440
          %v442 = vmul.f32 %v414, 1.442695
          %v443 = vpow.pop %v442
          %v444 = vmul.f32 %v415, 1.442695
          %v445 = vpow.pop %v444
          %v446 = vmul.f32 %v416, 1.442695
          %v447 = vpow.pop %v446
          %v448 = vmul.f32 %v417, 1.442695
          %v449 = vpow.pop %v448
          %450 = vadd.xlane.f32.xlu0 %v419
          %v451 = vpop.xlane.xlu0 %450
          %452 = vadd.xlane.f32.xlu0 %v421
          %v453 = vpop.xlane.xlu0 %452
          %454 = vadd.xlane.f32.xlu0 %v423
          %v455 = vpop.xlane.xlu0 %454
          %456 = vadd.xlane.f32.xlu0 %v425
          %v457 = vpop.xlane.xlu0 %456
          %458 = vadd.xlane.f32.xlu0 %v427
          %v459 = vpop.xlane.xlu0 %458
          %460 = vadd.xlane.f32.xlu0 %v429
          %v461 = vpop.xlane.xlu0 %460
          %462 = vadd.xlane.f32.xlu0 %v431
          %v463 = vpop.xlane.xlu0 %462
          %464 = vadd.xlane.f32.xlu0 %v433
          %v465 = vpop.xlane.xlu0 %464
          %466 = vadd.xlane.f32.xlu0 %v435
          %v467 = vpop.xlane.xlu0 %466
          %468 = vadd.xlane.f32.xlu0 %v437
          %v469 = vpop.xlane.xlu0 %468
          %470 = vadd.xlane.f32.xlu0 %v439
          %v471 = vpop.xlane.xlu0 %470
          %472 = vadd.xlane.f32.xlu0 %v441
          %v473 = vpop.xlane.xlu0 %472
          %474 = vadd.xlane.f32.xlu0 %v443
          %v475 = vpop.xlane.xlu0 %474
          %476 = vadd.xlane.f32.xlu0 %v445
          %v477 = vpop.xlane.xlu0 %476
          %478 = vadd.xlane.f32.xlu0 %v447
          %v479 = vpop.xlane.xlu0 %478
          %480 = vadd.xlane.f32.xlu0 %v449
          %v481 = vpop.xlane.xlu0 %480
          %v482 = vrcp.pop %v451
          %v483 = vrcp.pop %v453
          %v484 = vrcp.pop %v455
          %v485 = vrcp.pop %v457
          %v486 = vrcp.pop %v459
          %v487 = vrcp.pop %v461
          %v488 = vrcp.pop %v463
          %v489 = vrcp.pop %v465
          %v490 = vrcp.pop %v467
          %v491 = vrcp.pop %v469
          %v492 = vrcp.pop %v471
          %v493 = vrcp.pop %v473
          %v494 = vrcp.pop %v475
          %v495 = vrcp.pop %v477
          %v496 = vrcp.pop %v479
          %v497 = vrcp.pop %v481
          %v498 = vmul.f32 %v419, %v482
          %v499 = vmul.f32 %v421, %v483
          %v500 = vmul.f32 %v423, %v484
          %v501 = vmul.f32 %v425, %v485
          %v502 = vmul.f32 %v427, %v486
          %v503 = vmul.f32 %v429, %v487
          %v504 = vmul.f32 %v431, %v488
          %v505 = vmul.f32 %v433, %v489
          %v506 = vmul.f32 %v435, %v490
          %v507 = vmul.f32 %v437, %v491
          %v508 = vmul.f32 %v439, %v492
          %v509 = vmul.f32 %v441, %v493
          %v510 = vmul.f32 %v443, %v494
          %v511 = vmul.f32 %v445, %v495
          %v512 = vmul.f32 %v447, %v496
          %v513 = vmul.f32 %v449, %v497
          %v514 = vpack.c.bf16 %v499, %v498
          %v515 = vpack.c.bf16 %v501, %v500
          %v516 = vpack.c.bf16 %v503, %v502
          %v517 = vpack.c.bf16 %v505, %v504
          %v518 = vpack.c.bf16 %v507, %v506
          %v519 = vpack.c.bf16 %v509, %v508
          %v520 = vpack.c.bf16 %v511, %v510
          %v521 = vpack.c.bf16 %v513, %v512
          %522 = vmatpush.bf16.xpose.msra.mxu0 %v521
          %523 = vmatpush.bf16.xpose.msra.mxu0 %v520
          %524 = vmatpush.bf16.xpose.msra.mxu0 %v519
          %525 = vmatpush.bf16.xpose.msra.mxu0 %v518
          %526 = vmatpush.bf16.xpose.msra.mxu0 %v517
          %527 = vmatpush.bf16.xpose.msra.mxu0 %v516
          %528 = vmatpush.bf16.xpose.msra.mxu0 %v515
          %529 = vmatpush.bf16.xpose.msra.mxu0 %v514
          %530 = vmatmul.bf16.gmra.mxu0 %v274
          %v531 = vpop.f32.mrf.mxu0
          %v532 = vadd.f32 0.0, %v531
          %v533 = vpop.f32.mrf.mxu0
          %v534 = vadd.f32 0.0, %v533
          %535 = vmatmul.bf16.gmra.mxu0 %v275
          %v536 = vpop.f32.mrf.mxu0
          %v537 = vadd.f32 0.0, %v536
          %v538 = vpop.f32.mrf.mxu0
          %v539 = vadd.f32 0.0, %v538
          %540 = vdwg.mxu0
          %v541 = vstv %s178
          %v542 = vmul.f32 %v541, %v532
          %v543 = vmul.f32 %v541, %v534
          %v544 = vmul.f32 %v541, %v537
          %v545 = vmul.f32 %v541, %v539
          %v546 = vadd.f32 %v542, %v202
          %v547 = vadd.f32 %v543, %v203
          %v548 = vadd.f32 %v544, %v204
          %v549 = vadd.f32 %v545, %v205
          %s550 = scalar_lea.vmem %s168, %s200 [#allocation4]
          %551 = vst [vmem:[%s550] sm:$0xff] %v546
          %552 = vst [vmem:[%s550 + $0x8] sm:$0xff] %v547
          %553 = vst [vmem:[%s550 + $0x10] sm:$0xff] %v548
          %554 = vst [vmem:[%s550 + $0x18] sm:$0xff] %v549
        $region37: #{tpu_custom_call.1} parent=31 // loop_footer
          %s199 = sadd.s32 1, %s195
        $region38: #{tpu_custom_call.1} parent=31 // loop_footer_branch
          %194 = sbr.rel target = $region34
        $region39: #{tpu_custom_call.1} parent=31 // loop_exit
          _
        %s555 = sand.u32 %s95, 1
        %s556 = scalar_lea.sflag [#allocation5], %s555
        %s557 = sand.u32 %s95, 1
        %s558 = smul.addr %s557, 64
        %s559 = scalar_lea.vmem [#allocation4], %s558
        // Predicated region
        $region40: #{tpu_custom_call.1} parent=31 // pred_check
          %p560 = pneg %p105
        $region41: #{tpu_custom_call.1} parent=31 // pred_check_branch
          %562 = sbr.rel (%p560) target = $region43
        $region42: #{tpu_custom_call.1} parent=31 // pred_region
          %s563 = smul.u32 2, %s19
          %565 = vsyncadd %s556, 0
          %s566 = smul.addr %s563, 4
          %s567 = smul.addr %s566, 8
          %s568 = scalar_lea.hbm %s4, %s567
          %s569 = sshll.u32 %s559, 4
          %s570 = int_to_ptr.vmem [resolvable:$true] %s569
          %s571 = sshll.u32 %s568, 4
          %s572 = int_to_ptr.hbm [resolvable:$true] %s571
          %577 = dma.vmem_to_hbm [thread:$0]  %s570, 1024, %s572, %s556, 128, 128, 8
        $region43: #{tpu_custom_call.1} parent=31 // pred_fallthru
          _
      $region32: #{tpu_custom_call.1} parent=5 // pred_fallthru
        _
      %p578 = scmp.le.s32.totalorder 2, %s14
      // Predicated region
      $region44: #{tpu_custom_call.1} parent=5 // pred_check
        %p579 = pneg %p578
      $region45: #{tpu_custom_call.1} parent=5 // pred_check_branch
        %581 = sbr.rel (%p579) target = $region47
      $region46: #{tpu_custom_call.1} parent=5 // pred_region
        %s582 = ssub.s32 %s14, 2
        // Predicated region
        $region48: #{tpu_custom_call.1} parent=46 // pred_check
          %p583 = pneg %p111
        $region49: #{tpu_custom_call.1} parent=46 // pred_check_branch
          %585 = sbr.rel (%p583) target = $region51
        $region50: #{tpu_custom_call.1} parent=46 // pred_region
          %s586 = sand.u32 %s96, 1
          %s587 = scalar_lea.sflag [#allocation5], %s586
          %s588 = sand.u32 %s96, 1
          %s589 = smul.addr %s588, 64
          %s590 = scalar_lea.vmem [#allocation4], %s589
          %592 = dma.done %s587, 1024
        $region51: #{tpu_custom_call.1} parent=46 // pred_fallthru
          _
      $region47: #{tpu_custom_call.1} parent=5 // pred_fallthru
        _
    $region6: #{tpu_custom_call.1} parent=1 // loop_footer
      %s18 = sadd.s32 1, %s14
    $region7: #{tpu_custom_call.1} parent=1 // loop_footer_branch
      %13 = sbr.rel target = $region3
    $region8: #{tpu_custom_call.1} parent=1 // loop_exit
      _
    %593 = vsyncpa [#allocation5], 1
    %s594 = scalar_lea.sflag [#allocation5], 1
    %595 = vsyncpa %s594, 1

// kernel: tpu_custom_call.1
$region0: #{tpu_custom_call.1}
  #allocation0 [shape = 'u32[]', space=smem, size = 0x4, offset = 0x4, fixed_abs, tag = 'smem constant byte address 0x4 - core index']
  #allocation1 [shape = 'u32[72,128]{1,0:T(1,128)}', space=vmem, size = 0x9000, scoped, tag = 'internal scratch']
  #allocation2 [shape = 's32[1]{0}', space=sflag, size = 0x4, scoped, tag = 'scoped memory for tpu_custom_call.1']
  #allocation3 [shape = 'f32[1]{0:T(128)S(6)}', space=smem, size = 0x200, scoped, tag = 'prefetched SMEM operand 0']
  %s0 = inlined_call_operand.<no memory space> [shape: f32[1], index: 0, kind: input, shape index: {}]
  %s1 = inlined_call_operand.vmem [shape: f32[4,32,128], index: 1, kind: input, shape index: {}]
  %s2 = inlined_call_operand.vmem [shape: f32[48,32], index: 2, kind: input, shape index: {}]
  %s3 = inlined_call_operand.vmem [shape: f32[48,1], index: 3, kind: input, shape index: {}]
  %s4 = inlined_call_operand.hbm [shape: f32[4,32,128], index: 4, kind: output, shape index: {}]
  %s5 = sld [smem:[#allocation0]]
  $region52: #{tpu_custom_call.1} parent=0
    _
  %s7 = ssub.s32 1, %s5
  %s8 = scalar_select 0, %s7, %s5
  %9 = sst [smem:[#allocation3]] %s0
  $region1: #{tpu_custom_call.1} parent=0
    #allocation4 [shape = 'u8[65536]{0}', space=vmem, size = 0x10000, scoped, tag = 'output window, operand 0']
    #allocation5 [shape = 's32[2]{0}', space=sflag, size = 0x8, scoped, tag = 'scoped memory for tpu_custom_call.1']
    %10 = vsyncpa [#allocation5], 0
    %s11 = scalar_lea.sflag [#allocation5], 1
    %12 = vsyncpa %s11, 0
    loop: start=0, step=1, limit=4
    $region2: #{tpu_custom_call.1} parent=1 // loop_pre_header
      _
    $region3: #{tpu_custom_call.1} parent=1 // loop_header
      %s14 = sphi 0, %s18
      %p15 = scmp.ge.s32.totalorder %s14, 4
      %s24 = sphi 0, %s26
      %s27 = sphi 0, %s24
      %s28 = sphi 0, %s27
      %s44 = sphi 0, %s28
      %s48 = sphi 0, %s48
      %s50 = sphi 0, %s48
      %s51 = sphi 0, %s50
      %s65 = sphi 0, %s51
      %s69 = sphi 0, %s69
      %s71 = sphi 0, %s69
      %s72 = sphi 0, %s71
      %s86 = sphi 0, %s72
      %s92 = sphi 0, %s94
      %s95 = sphi 0, %s92
      %s96 = sphi 0, %s95
      %s112 = sphi 0, %s96
    $region4: #{tpu_custom_call.1} parent=1 // loop_header_branch
      %17 = sbr.rel (%p15) target = $region8
    $region5: #{tpu_custom_call.1} parent=1 // loop_body
      %s19 = ssub.s32 %s14, 1
      %s20 = ssub.s32 %s14, 2
      %s21 = sadd.s32 %s14, 1
      %s22 = ssub.s32 %s14, %s21
      %p23 = scmp.eq.s32.totalorder %s22, 0
      %s25 = sadd.s32 %s24, 1
      %s26 = scalar_select %p23, %s24, %s25
      %p29 = pneg %p23
      %p30 = scmp.eq.s32.totalorder %s14, 1
      %p31 = por %p29, %p30
      %p32 = scmp.ne.s32.totalorder %s24, %s27
      %p33 = scmp.eq.s32.totalorder %s14, 0
      %p34 = por %p32, %p33
      %p35 = scmp.ne.s32.totalorder %s24, %s27
      %p36 = scmp.eq.s32.totalorder %s19, 1
      %p37 = por %p35, %p36
      %p38 = scmp.ne.s32.totalorder %s27, %s28
      %p39 = scmp.eq.s32.totalorder %s19, 0
      %p40 = por %p38, %p39
      %p41 = scmp.ne.s32.totalorder %s27, %s28
      %p42 = scmp.eq.s32.totalorder %s20, 1
      %p43 = por %p41, %p42
      %p45 = scmp.ne.s32.totalorder %s28, %s44
      %p46 = scmp.eq.s32.totalorder %s20, 0
      %p47 = por %p45, %p46
      %s49 = sadd.s32 %s48, 1
      %p52 = scmp.eq.s32.totalorder %s14, 1
      %p53 = scmp.ne.s32.totalorder %s48, %s50
      %p54 = scmp.eq.s32.totalorder %s14, 0
      %p55 = por %p53, %p54
      %p56 = scmp.ne.s32.totalorder %s48, %s50
      %p57 = scmp.eq.s32.totalorder %s19, 1
      %p58 = por %p56, %p57
      %p59 = scmp.ne.s32.totalorder %s50, %s51
      %p60 = scmp.eq.s32.totalorder %s19, 0
      %p61 = por %p59, %p60
      %p62 = scmp.ne.s32.totalorder %s50, %s51
      %p63 = scmp.eq.s32.totalorder %s20, 1
      %p64 = por %p62, %p63
      %p66 = scmp.ne.s32.totalorder %s51, %s65
      %p67 = scmp.eq.s32.totalorder %s20, 0
      %p68 = por %p66, %p67
      %s70 = sadd.s32 %s69, 1
      %p73 = scmp.eq.s32.totalorder %s14, 1
      %p74 = scmp.ne.s32.totalorder %s69, %s71
      %p75 = scmp.eq.s32.totalorder %s14, 0
      %p76 = por %p74, %p75
      %p77 = scmp.ne.s32.totalorder %s69, %s71
      %p78 = scmp.eq.s32.totalorder %s19, 1
      %p79 = por %p77, %p78
      %p80 = scmp.ne.s32.totalorder %s71, %s72
      %p81 = scmp.eq.s32.totalorder %s19, 0
      %p82 = por %p80, %p81
      %p83 = scmp.ne.s32.totalorder %s71, %s72
      %p84 = scmp.eq.s32.totalorder %s20, 1
      %p85 = por %p83, %p84
      %p87 = scmp.ne.s32.totalorder %s72, %s86
      %p88 = scmp.eq.s32.totalorder %s20, 0
      %p89 = por %p87, %p88
      %s90 = ssub.s32 %s14, %s21
      %p91 = scmp.eq.s32.totalorder %s90, 0
      %s93 = sadd.s32 %s92, 1
      %s94 = scalar_select %p91, %s92, %s93
      %p97 = pneg %p91
      %p98 = scmp.eq.s32.totalorder %s14, 1
      %p99 = por %p97, %p98
      %p100 = scmp.ne.s32.totalorder %s92, %s95
      %p101 = scmp.eq.s32.totalorder %s14, 0
      %p102 = por %p100, %p101
      %p103 = scmp.ne.s32.totalorder %s92, %s95
      %p104 = scmp.eq.s32.totalorder %s19, 1
      %p105 = por %p103, %p104
      %p106 = scmp.ne.s32.totalorder %s95, %s96
      %p107 = scmp.eq.s32.totalorder %s19, 0
      %p108 = por %p106, %p107
      %p109 = scmp.ne.s32.totalorder %s95, %s96
      %p110 = scmp.eq.s32.totalorder %s20, 1
      %p111 = por %p109, %p110
      %p113 = scmp.ne.s32.totalorder %s96, %s112
      %p114 = scmp.eq.s32.totalorder %s20, 0
      %p115 = por %p113, %p114
      %p116 = scmp.le.s32.totalorder 1, %s14
      %p117 = scmp.lt.s32.totalorder %s14, 3
      %p118 = pnand %p116, %p117
      %p119 = pneg %p118
      // Predicated region
      $region9: #{tpu_custom_call.1} parent=5 // pred_check
        _
      $region10: #{tpu_custom_call.1} parent=5 // pred_check_branch
        %121 = sbr.rel (%p118) target = $region12
      $region11: #{tpu_custom_call.1} parent=5 // pred_region
        %s122 = ssub.s32 %s14, 1
        // Predicated region
        $region13: #{tpu_custom_call.1} parent=11 // pred_check
          %p123 = pneg %p61
        $region14: #{tpu_custom_call.1} parent=11 // pred_check_branch
          %125 = sbr.rel (%p123) target = $region16
        $region15: #{tpu_custom_call.1} parent=11 // pred_region
          _
        $region16: #{tpu_custom_call.1} parent=11 // pred_fallthru
          _
        // Predicated region
        $region17: #{tpu_custom_call.1} parent=11 // pred_check
          %p126 = pneg %p82
        $region18: #{tpu_custom_call.1} parent=11 // pred_check_branch
          %128 = sbr.rel (%p126) target = $region20
        $region19: #{tpu_custom_call.1} parent=11 // pred_region
          _
        $region20: #{tpu_custom_call.1} parent=11 // pred_fallthru
          _
      $region12: #{tpu_custom_call.1} parent=5 // pred_fallthru
        _
      %p129 = scmp.lt.s32.totalorder %s14, 2
      // Predicated region
      $region21: #{tpu_custom_call.1} parent=5 // pred_check
        %p130 = pneg %p129
      $region22: #{tpu_custom_call.1} parent=5 // pred_check_branch
        %132 = sbr.rel (%p130) target = $region24
      $region23: #{tpu_custom_call.1} parent=5 // pred_region
        // Predicated region
        $region25: #{tpu_custom_call.1} parent=23 // pred_check
          %p133 = pneg %p34
        $region26: #{tpu_custom_call.1} parent=23 // pred_check_branch
          %135 = sbr.rel (%p133) target = $region28
        $region27: #{tpu_custom_call.1} parent=23 // pred_region
          %s136 = smul.u32 2, %s14
          %p137 = scmp.lt.s32.totalorder %s136, 3
          %s138 = scalar_select %p137, %s136, 3
          %s139 = smul.addr %s138, 4
          %s140 = smul.addr %s139, 8
          %s141 = scalar_lea.vmem %s1, %s140
          %s142 = smul.u32 2, %s14
        $region28: #{tpu_custom_call.1} parent=23 // pred_fallthru
          _
      $region24: #{tpu_custom_call.1} parent=5 // pred_fallthru
        _
      %p143 = scmp.le.s32.totalorder 1, %s14
      %p144 = scmp.lt.s32.totalorder %s14, 3
      %p145 = pnand %p143, %p144
      %p146 = pneg %p145
      // Predicated region
      $region29: #{tpu_custom_call.1} parent=5 // pred_check
        _
      $region30: #{tpu_custom_call.1} parent=5 // pred_check_branch
        %148 = sbr.rel (%p145) target = $region32
      $region31: #{tpu_custom_call.1} parent=5 // pred_region
        %s149 = ssub.s32 %s14, 1
        %s150 = smul.u32 2, %s19
        %p151 = scmp.lt.s32.totalorder %s150, 3
        %s152 = scalar_select %p151, %s150, 3
        %s153 = smul.addr %s152, 4
        %s154 = smul.addr %s153, 8
        %s155 = scalar_lea.vmem %s1, %s154
        %p156 = pneg %p40
        %p157 = pneg %p37
        %p158 = pneg %p61
        %p159 = pneg %p58
        %p160 = pneg %p82
        %p161 = pneg %p79
        %p162 = pneg %p108
        %p163 = pneg %p105
        %s164 = sand.u32 %s95, 1
        %s165 = scalar_lea.sflag [#allocation5], %s164
        %s166 = sand.u32 %s95, 1
        %s167 = smul.addr %s166, 64
        %s168 = scalar_lea.vmem [#allocation4], %s167
        %s169 = smul.u32 2, %s19
        %p170 = scmp.lt.s32.totalorder %s169, 3
        %s171 = scalar_select %p170, %s169, 3
        %s172 = smul.addr %s171, 4
        %s173 = smul.addr %s172, 8
        %s174 = scalar_lea.vmem %s1, %s173
        %s175 = smul.u32 2, %s19
        %s176 = smul.u32 2, %s19
        %s178 = sld [smem:[#allocation3]]
        %v179 = vld [vmem:[%s2] sm:$0xff]
        %v180 = vld [vmem:[%s2 + $0x8] sm:$0xff]
        %v181 = vld [vmem:[%s2 + $0x10] sm:$0xff]
        %v182 = vld [vmem:[%s2 + $0x18] sm:$0xff]
        %v183 = vld [vmem:[%s2 + $0x20] sm:$0xff]
        %v184 = vld [vmem:[%s2 + $0x28] sm:$0xff]
        %v185 = vpack.c.bf16 %v180, %v179
        %v186 = vpack.c.bf16 %v182, %v181
        %v187 = vpack.c.bf16 %v184, %v183
        %v188 = vld [vmem:[%s3] sm:$0xff]
        %v189 = vld [vmem:[%s3 + $0x8] sm:$0xff]
        %v190 = vld [vmem:[%s3 + $0x10] sm:$0xff]
        %v191 = vld [vmem:[%s3 + $0x18] sm:$0xff]
        %v192 = vld [vmem:[%s3 + $0x20] sm:$0xff]
        %v193 = vld [vmem:[%s3 + $0x28] sm:$0xff]
        loop: start=0, step=1, limit=2
        $region33: #{tpu_custom_call.1} parent=31 // loop_pre_header
          _
        $region34: #{tpu_custom_call.1} parent=31 // loop_header
          %s195 = sphi 0, %s199
          %p196 = scmp.ge.s32.totalorder %s195, 2
        $region35: #{tpu_custom_call.1} parent=31 // loop_header_branch
          %198 = sbr.rel (%p196) target = $region39
        $region36: #{tpu_custom_call.1} parent=31 // loop_body
          %s200 = smul.u32 %s195, 32
          %s201 = scalar_lea.vmem %s174, %s200
          %v202 = vld [vmem:[%s201] sm:$0xff]
          %v203 = vld [vmem:[%s201 + $0x8] sm:$0xff]
          %v204 = vld [vmem:[%s201 + $0x10] sm:$0xff]
          %v205 = vld [vmem:[%s201 + $0x18] sm:$0xff]
          %v206 = vpack.c.bf16 %v203, %v202
          %v207 = vpack.c.bf16 %v205, %v204
          %209 = vset.pattern.permute.xlu0 0
          %210 = vperm.xlu0 %209, %v188
          %v211 = vpop.permute.xlu0 %210
          %214 = vset.pattern.permute.xlu0 0
          %215 = vperm.xlu0 %214, %v189
          %v216 = vpop.permute.xlu0 %215
          %219 = vset.pattern.permute.xlu0 0
          %220 = vperm.xlu0 %219, %v190
          %v221 = vpop.permute.xlu0 %220
          %224 = vset.pattern.permute.xlu0 0
          %225 = vperm.xlu0 %224, %v191
          %v226 = vpop.permute.xlu0 %225
          %229 = vset.pattern.permute.xlu0 0
          %230 = vperm.xlu0 %229, %v192
          %v231 = vpop.permute.xlu0 %230
          %234 = vset.pattern.permute.xlu0 0
          %235 = vperm.xlu0 %234, %v193
          %v236 = vpop.permute.xlu0 %235
          %vm238 = vcmask 261120
          %v240 = vsel %vm238, %v185, 0
          %v243 = vsel %vm238, %v186, 0
          %v246 = vsel %vm238, %v187, 0
          %248 = vmatpush.bf16.msra.mxu0 0
          %249 = vmatpush.bf16.msra.mxu0 0
          %250 = vmatpush.bf16.msra.mxu0 0
          %251 = vmatpush.bf16.msra.mxu0 0
          %252 = vmatpush.bf16.msra.mxu0 0
          %253 = vmatpush.bf16.msra.mxu0 0
          %254 = vmatpush.bf16.msra.mxu0 %v207
          %255 = vmatpush.bf16.msra.mxu0 %v206
          %256 = vmatmul.bf16.gmra.mxu0 %v240
          %v257 = vpop.f32.mrf.mxu0
          %v258 = vadd.f32 %v211, %v257
          %v259 = vpop.f32.mrf.mxu0
          %v260 = vadd.f32 %v216, %v259
          %261 = vmatmul.bf16.gmra.mxu0 %v243
          %v262 = vpop.f32.mrf.mxu0
          %v263 = vadd.f32 %v221, %v262
          %v264 = vpop.f32.mrf.mxu0
          %v265 = vadd.f32 %v226, %v264
          %266 = vmatmul.bf16.gmra.mxu0 %v246
          %v267 = vpop.f32.mrf.mxu0
          %v268 = vadd.f32 %v231, %v267
          %v269 = vpop.f32.mrf.mxu0
          %v270 = vadd.f32 %v236, %v269
          %271 = vdwg.mxu0
          %v272 = vpack.c.bf16 %v258, %v258
          %v273 = vpack.c.bf16 %v260, %v260
          %v274 = vpack.c.bf16 %v265, %v263
          %v275 = vpack.c.bf16 %v270, %v268
          %276 = vxpose.xlu0.c.b16.start [1/8] %v272, 128
          %277 = vxpose.xlu0.c.b16.cont [2/8] 0, 128
          %278 = vxpose.xlu0.c.b16.cont [3/8] 0, 128
          %279 = vxpose.xlu0.c.b16.cont [4/8] 0, 128
          %280 = vxpose.xlu0.c.b16.cont [5/8] 0, 128
          %281 = vxpose.xlu0.c.b16.cont [6/8] 0, 128
          %282 = vxpose.xlu0.c.b16.cont [7/8] 0, 128
          %283 = vxpose.xlu0.c.b16.end [8/8] 0, 128
          %v284 = vpop.trf.xlu0
          %v285 = vpop.trf.xlu0
          %v286 = vpop.trf.xlu0
          %v287 = vpop.trf.xlu0
          %v288 = vpop.trf.xlu0
          %v289 = vpop.trf.xlu0
          %v290 = vpop.trf.xlu0
          %v291 = vpop.trf.xlu0
          %vm292 = vcmask 64512
          %v294 = vsel %vm292, %v284, 0
          %v297 = vsel %vm292, %v285, 0
          %v300 = vsel %vm292, %v286, 0
          %v303 = vsel %vm292, %v287, 0
          %v306 = vsel %vm292, %v288, 0
          %v309 = vsel %vm292, %v289, 0
          %v312 = vsel %vm292, %v290, 0
          %v315 = vsel %vm292, %v291, 0
          %vm317 = vcmask 1043456
          %v319 = vsel %vm317, %v273, 0
          %321 = vmatpush.bf16.msra.mxu0 0
          %322 = vmatpush.bf16.msra.mxu0 0
          %323 = vmatpush.bf16.msra.mxu0 0
          %324 = vmatpush.bf16.msra.mxu0 0
          %325 = vmatpush.bf16.msra.mxu0 0
          %326 = vmatpush.bf16.msra.mxu0 0
          %327 = vmatpush.bf16.msra.mxu0 0
          %328 = vmatpush.bf16.msra.mxu0 %v319
          %329 = vmatmul.bf16.gmra.mxu0 %v294
          %v330 = vpop.f32.mrf.mxu0
          %v331 = vadd.f32 0.0, %v330
          %v332 = vpop.f32.mrf.mxu0
          %v333 = vadd.f32 0.0, %v332
          %334 = vmatmul.bf16.gmra.mxu0 %v297
          %v335 = vpop.f32.mrf.mxu0
          %v336 = vadd.f32 0.0, %v335
          %v337 = vpop.f32.mrf.mxu0
          %v338 = vadd.f32 0.0, %v337
          %339 = vmatmul.bf16.gmra.mxu0 %v300
          %v340 = vpop.f32.mrf.mxu0
          %v341 = vadd.f32 0.0, %v340
          %v342 = vpop.f32.mrf.mxu0
          %v343 = vadd.f32 0.0, %v342
          %344 = vmatmul.bf16.gmra.mxu0 %v303
          %v345 = vpop.f32.mrf.mxu0
          %v346 = vadd.f32 0.0, %v345
          %v347 = vpop.f32.mrf.mxu0
          %v348 = vadd.f32 0.0, %v347
          %349 = vmatmul.bf16.gmra.mxu0 %v306
          %v350 = vpop.f32.mrf.mxu0
          %v351 = vadd.f32 0.0, %v350
          %v352 = vpop.f32.mrf.mxu0
          %v353 = vadd.f32 0.0, %v352
          %354 = vmatmul.bf16.gmra.mxu0 %v309
          %v355 = vpop.f32.mrf.mxu0
          %v356 = vadd.f32 0.0, %v355
          %v357 = vpop.f32.mrf.mxu0
          %v358 = vadd.f32 0.0, %v357
          %359 = vmatmul.bf16.gmra.mxu0 %v312
          %v360 = vpop.f32.mrf.mxu0
          %v361 = vadd.f32 0.0, %v360
          %v362 = vpop.f32.mrf.mxu0
          %v363 = vadd.f32 0.0, %v362
          %364 = vmatmul.bf16.gmra.mxu0 %v315
          %v365 = vpop.f32.mrf.mxu0
          %v366 = vadd.f32 0.0, %v365
          %v367 = vpop.f32.mrf.mxu0
          %v368 = vadd.f32 0.0, %v367
          %369 = vdwg.mxu0
          %370 = vmax.xlane.f32.xlu0 %v331
          %v371 = vpop.xlane.xlu0 %370
          %372 = vmax.xlane.f32.xlu0 %v333
          %v373 = vpop.xlane.xlu0 %372
          %374 = vmax.xlane.f32.xlu0 %v336
          %v375 = vpop.xlane.xlu0 %374
          %376 = vmax.xlane.f32.xlu0 %v338
          %v377 = vpop.xlane.xlu0 %376
          %378 = vmax.xlane.f32.xlu0 %v341
          %v379 = vpop.xlane.xlu0 %378
          %380 = vmax.xlane.f32.xlu0 %v343
          %v381 = vpop.xlane.xlu0 %380
          %382 = vmax.xlane.f32.xlu0 %v346
          %v383 = vpop.xlane.xlu0 %382
          %384 = vmax.xlane.f32.xlu0 %v348
          %v385 = vpop.xlane.xlu0 %384
          %386 = vmax.xlane.f32.xlu0 %v351
          %v387 = vpop.xlane.xlu0 %386
          %388 = vmax.xlane.f32.xlu0 %v353
          %v389 = vpop.xlane.xlu0 %388
          %390 = vmax.xlane.f32.xlu0 %v356
          %v391 = vpop.xlane.xlu0 %390
          %392 = vmax.xlane.f32.xlu0 %v358
          %v393 = vpop.xlane.xlu0 %392
          %394 = vmax.xlane.f32.xlu0 %v361
          %v395 = vpop.xlane.xlu0 %394
          %396 = vmax.xlane.f32.xlu0 %v363
          %v397 = vpop.xlane.xlu0 %396
          %398 = vmax.xlane.f32.xlu0 %v366
          %v399 = vpop.xlane.xlu0 %398
          %400 = vmax.xlane.f32.xlu0 %v368
          %v401 = vpop.xlane.xlu0 %400
          %v402 = vsub.f32 %v331, %v371
          %v403 = vsub.f32 %v333, %v373
          %v404 = vsub.f32 %v336, %v375
          %v405 = vsub.f32 %v338, %v377
          %v406 = vsub.f32 %v341, %v379
          %v407 = vsub.f32 %v343, %v381
          %v408 = vsub.f32 %v346, %v383
          %v409 = vsub.f32 %v348, %v385
          %v410 = vsub.f32 %v351, %v387
          %v411 = vsub.f32 %v353, %v389
          %v412 = vsub.f32 %v356, %v391
          %v413 = vsub.f32 %v358, %v393
          %v414 = vsub.f32 %v361, %v395
          %v415 = vsub.f32 %v363, %v397
          %v416 = vsub.f32 %v366, %v399
          %v417 = vsub.f32 %v368, %v401
          %v418 = vmul.f32 %v402, 1.442695
          %v419 = vpow.pop %v418
          %v420 = vmul.f32 %v403, 1.442695
          %v421 = vpow.pop %v420
          %v422 = vmul.f32 %v404, 1.442695
          %v423 = vpow.pop %v422
          %v424 = vmul.f32 %v405, 1.442695
          %v425 = vpow.pop %v424
          %v426 = vmul.f32 %v406, 1.442695
          %v427 = vpow.pop %v426
          %v428 = vmul.f32 %v407, 1.442695
          %v429 = vpow.pop %v428
          %v430 = vmul.f32 %v408, 1.442695
          %v431 = vpow.pop %v430
          %v432 = vmul.f32 %v409, 1.442695
          %v433 = vpow.pop %v432
          %v434 = vmul.f32 %v410, 1.442695
          %v435 = vpow.pop %v434
          %v436 = vmul.f32 %v411, 1.442695
          %v437 = vpow.pop %v436
          %v438 = vmul.f32 %v412, 1.442695
          %v439 = vpow.pop %v438
          %v440 = vmul.f32 %v413, 1.442695
          %v441 = vpow.pop %v440
          %v442 = vmul.f32 %v414, 1.442695
          %v443 = vpow.pop %v442
          %v444 = vmul.f32 %v415, 1.442695
          %v445 = vpow.pop %v444
          %v446 = vmul.f32 %v416, 1.442695
          %v447 = vpow.pop %v446
          %v448 = vmul.f32 %v417, 1.442695
          %v449 = vpow.pop %v448
          %450 = vadd.xlane.f32.xlu0 %v419
          %v451 = vpop.xlane.xlu0 %450
          %452 = vadd.xlane.f32.xlu0 %v421
          %v453 = vpop.xlane.xlu0 %452
          %454 = vadd.xlane.f32.xlu0 %v423
          %v455 = vpop.xlane.xlu0 %454
          %456 = vadd.xlane.f32.xlu0 %v425
          %v457 = vpop.xlane.xlu0 %456
          %458 = vadd.xlane.f32.xlu0 %v427
          %v459 = vpop.xlane.xlu0 %458
          %460 = vadd.xlane.f32.xlu0 %v429
          %v461 = vpop.xlane.xlu0 %460
          %462 = vadd.xlane.f32.xlu0 %v431
          %v463 = vpop.xlane.xlu0 %462
          %464 = vadd.xlane.f32.xlu0 %v433
          %v465 = vpop.xlane.xlu0 %464
          %466 = vadd.xlane.f32.xlu0 %v435
          %v467 = vpop.xlane.xlu0 %466
          %468 = vadd.xlane.f32.xlu0 %v437
          %v469 = vpop.xlane.xlu0 %468
          %470 = vadd.xlane.f32.xlu0 %v439
          %v471 = vpop.xlane.xlu0 %470
          %472 = vadd.xlane.f32.xlu0 %v441
          %v473 = vpop.xlane.xlu0 %472
          %474 = vadd.xlane.f32.xlu0 %v443
          %v475 = vpop.xlane.xlu0 %474
          %476 = vadd.xlane.f32.xlu0 %v445
          %v477 = vpop.xlane.xlu0 %476
          %478 = vadd.xlane.f32.xlu0 %v447
          %v479 = vpop.xlane.xlu0 %478
          %480 = vadd.xlane.f32.xlu0 %v449
          %v481 = vpop.xlane.xlu0 %480
          %v482 = vrcp.pop %v451
          %v483 = vrcp.pop %v453
          %v484 = vrcp.pop %v455
          %v485 = vrcp.pop %v457
          %v486 = vrcp.pop %v459
          %v487 = vrcp.pop %v461
          %v488 = vrcp.pop %v463
          %v489 = vrcp.pop %v465
          %v490 = vrcp.pop %v467
          %v491 = vrcp.pop %v469
          %v492 = vrcp.pop %v471
          %v493 = vrcp.pop %v473
          %v494 = vrcp.pop %v475
          %v495 = vrcp.pop %v477
          %v496 = vrcp.pop %v479
          %v497 = vrcp.pop %v481
          %v498 = vmul.f32 %v419, %v482
          %v499 = vmul.f32 %v421, %v483
          %v500 = vmul.f32 %v423, %v484
          %v501 = vmul.f32 %v425, %v485
          %v502 = vmul.f32 %v427, %v486
          %v503 = vmul.f32 %v429, %v487
          %v504 = vmul.f32 %v431, %v488
          %v505 = vmul.f32 %v433, %v489
          %v506 = vmul.f32 %v435, %v490
          %v507 = vmul.f32 %v437, %v491
          %v508 = vmul.f32 %v439, %v492
          %v509 = vmul.f32 %v441, %v493
          %v510 = vmul.f32 %v443, %v494
          %v511 = vmul.f32 %v445, %v495
          %v512 = vmul.f32 %v447, %v496
          %v513 = vmul.f32 %v449, %v497
          %v514 = vpack.c.bf16 %v499, %v498
          %v515 = vpack.c.bf16 %v501, %v500
          %v516 = vpack.c.bf16 %v503, %v502
          %v517 = vpack.c.bf16 %v505, %v504
          %v518 = vpack.c.bf16 %v507, %v506
          %v519 = vpack.c.bf16 %v509, %v508
          %v520 = vpack.c.bf16 %v511, %v510
          %v521 = vpack.c.bf16 %v513, %v512
          %522 = vmatpush.bf16.xpose.msra.mxu0 %v521
          %523 = vmatpush.bf16.xpose.msra.mxu0 %v520
          %524 = vmatpush.bf16.xpose.msra.mxu0 %v519
          %525 = vmatpush.bf16.xpose.msra.mxu0 %v518
          %526 = vmatpush.bf16.xpose.msra.mxu0 %v517
          %527 = vmatpush.bf16.xpose.msra.mxu0 %v516
          %528 = vmatpush.bf16.xpose.msra.mxu0 %v515
          %529 = vmatpush.bf16.xpose.msra.mxu0 %v514
          %530 = vmatmul.bf16.gmra.mxu0 %v274
          %v531 = vpop.f32.mrf.mxu0
          %v532 = vadd.f32 0.0, %v531
          %v533 = vpop.f32.mrf.mxu0
          %v534 = vadd.f32 0.0, %v533
          %535 = vmatmul.bf16.gmra.mxu0 %v275
          %v536 = vpop.f32.mrf.mxu0
          %v537 = vadd.f32 0.0, %v536
          %v538 = vpop.f32.mrf.mxu0
          %v539 = vadd.f32 0.0, %v538
          %540 = vdwg.mxu0
          %v541 = vstv %s178
          %v542 = vmul.f32 %v541, %v532
          %v543 = vmul.f32 %v541, %v534
          %v544 = vmul.f32 %v541, %v537
          %v545 = vmul.f32 %v541, %v539
          %v546 = vadd.f32 %v542, %v202
          %v547 = vadd.f32 %v543, %v203
          %v548 = vadd.f32 %v544, %v204
          %v549 = vadd.f32 %v545, %v205
          %s550 = scalar_lea.vmem %s168, %s200 [#allocation4]
          %551 = vst [vmem:[%s550] sm:$0xff] %v546
          %552 = vst [vmem:[%s550 + $0x8] sm:$0xff] %v547
          %553 = vst [vmem:[%s550 + $0x10] sm:$0xff] %v548
          %554 = vst [vmem:[%s550 + $0x18] sm:$0xff] %v549
        $region37: #{tpu_custom_call.1} parent=31 // loop_footer
          %s199 = sadd.s32 1, %s195
        $region38: #{tpu_custom_call.1} parent=31 // loop_footer_branch
          %194 = sbr.rel target = $region34
        $region39: #{tpu_custom_call.1} parent=31 // loop_exit
          _
        %s555 = sand.u32 %s95, 1
        %s556 = scalar_lea.sflag [#allocation5], %s555
        %s557 = sand.u32 %s95, 1
        %s558 = smul.addr %s557, 64
        %s559 = scalar_lea.vmem [#allocation4], %s558
        // Predicated region
        $region40: #{tpu_custom_call.1} parent=31 // pred_check
          %p560 = pneg %p105
        $region41: #{tpu_custom_call.1} parent=31 // pred_check_branch
          %562 = sbr.rel (%p560) target = $region43
        $region42: #{tpu_custom_call.1} parent=31 // pred_region
          %s563 = smul.u32 2, %s19
          %565 = vsyncadd %s556, 0
          %s566 = smul.addr %s563, 4
          %s567 = smul.addr %s566, 8
          %s568 = scalar_lea.hbm %s4, %s567
          %s569 = sshll.u32 %s559, 4
          %s570 = int_to_ptr.vmem [resolvable:$true] %s569
          %s571 = sshll.u32 %s568, 4
          %s572 = int_to_ptr.hbm [resolvable:$true] %s571
          %577 = dma.vmem_to_hbm [thread:$0]  %s570, 1024, %s572, %s556, 128, 128, 8
        $region43: #{tpu_custom_call.1} parent=31 // pred_fallthru
          _
      $region32: #{tpu_custom_call.1} parent=5 // pred_fallthru
        _
      %p578 = scmp.le.s32.totalorder 2, %s14
      // Predicated region
      $region44: #{tpu_custom_call.1} parent=5 // pred_check
        %p579 = pneg %p578
      $region45: #{tpu_custom_call.1} parent=5 // pred_check_branch
        %581 = sbr.rel (%p579) target = $region47
      $region46: #{tpu_custom_call.1} parent=5 // pred_region
        %s582 = ssub.s32 %s14, 2
        // Predicated region
        $region48: #{tpu_custom_call.1} parent=46 // pred_check
          %p583 = pneg %p111
        $region49: #{tpu_custom_call.1} parent=46 // pred_check_branch
          %585 = sbr.rel (%p583) target = $region51
        $region50: #{tpu_custom_call.1} parent=46 // pred_region
          %s586 = sand.u32 %s96, 1
          %s587 = scalar_lea.sflag [#allocation5], %s586
          %s588 = sand.u32 %s96, 1
          %s589 = smul.addr %s588, 64
          %s590 = scalar_lea.vmem [#allocation4], %s589
          %592 = dma.done %s587, 1024
        $region51: #{tpu_custom_call.1} parent=46 // pred_fallthru
          _
      $region47: #{tpu_custom_call.1} parent=5 // pred_fallthru
        _
    $region6: #{tpu_custom_call.1} parent=1 // loop_footer
      %s18 = sadd.s32 1, %s14
    $region7: #{tpu_custom_call.1} parent=1 // loop_footer_branch
      %13 = sbr.rel target = $region3
    $region8: #{tpu_custom_call.1} parent=1 // loop_exit
      _
    %593 = vsyncpa [#allocation5], 1
    %s594 = scalar_lea.sflag [#allocation5], 1
    %595 = vsyncpa %s594, 1

</llo_original>
